<compile_context>
chip_gen: v5e
topology: v5e:2x2
jax: 0.10.0
libtpu: 0.0.40
codegen_flags: <defaults>
</compile_context>

<pallas_src>
import functools

import jax
import jax.numpy as jnp
from jax.experimental import pallas as pl
from jax.experimental.pallas import tpu as pltpu


def _round_up(v: int, m: int) -> int:
    return (v + m - 1) // m * m


def _legendre_kan_kernel(sb_ref, x_ref, w_ref, gamma_ref, beta_ref, out_ref,
                         *, degree: int, eps: float, fout_real: int):
    # x tile: (tb, Fin_pad), cast to f32 on the VPU (free filler under the matmul).
    x = x_ref[...].astype(jnp.float32)

    # Global normalization scalars precomputed in the wrapper (SMEM).
    scale = sb_ref[0]
    bias = sb_ref[1]

    # ---- basis slab: [SiLU(x) | P0 | P1 | ... | Pd] ----
    silu_x = x * jax.nn.sigmoid(x)
    xn = x * scale + bias

    p0 = jnp.ones_like(xn)
    pieces = [silu_x, p0]
    if degree >= 1:
        p_prev, p_cur = p0, xn
        pieces.append(p_cur)
        for n in range(1, degree):
            # (n+1) P_{n+1} = (2n+1) xn P_n - n P_{n-1}; divide folded to a const mul.
            p_next = ((2.0 * n + 1.0) * xn * p_cur - float(n) * p_prev) * (1.0 / (n + 1.0))
            pieces.append(p_next)
            p_prev, p_cur = p_cur, p_next

    basis = jnp.concatenate(pieces, axis=-1).astype(jnp.bfloat16)

    # ---- single fused MXU matmul, K = (degree+2)*Fin_pad ----
    y = jnp.dot(basis, w_ref[...], preferred_element_type=jnp.float32)  # (tb, Fout_pad) f32

    # ---- LayerNorm over the REAL out_features (padded columns of y are 0) ----
    inv_n = 1.0 / float(fout_real)
    s1 = jnp.sum(y, axis=-1, keepdims=True)
    s2 = jnp.sum(y * y, axis=-1, keepdims=True)
    mean = s1 * inv_n
    var = s2 * inv_n - mean * mean
    y_hat = (y - mean) * jax.lax.rsqrt(var + eps)
    y_hat = y_hat * gamma_ref[...] + beta_ref[...]

    # ---- final SiLU ----
    out_ref[...] = (y_hat * jax.nn.sigmoid(y_hat)).astype(out_ref.dtype)


def legendre_kan_forward(x, base_weight, poly_weight, ln_gamma, ln_beta,
                         *, degree: int = 3, eps: float = 1e-5,
                         block_b: int = 256):
    """x: (B, Fin). base_weight: (Fout, Fin). poly_weight: (Fout, Fin*(degree+1))."""
    B, Fin = x.shape
    Fout = base_weight.shape[0]

    Fin_p = _round_up(Fin, 128)
    Fout_p = _round_up(Fout, 128)
    tb = min(block_b, _round_up(B, 8))
    B_p = _round_up(B, tb)
    k_slab = (degree + 2) * Fin_p

    # ---- wrapper-side scalars: global min/max -> (scale, bias) for xn ----
    # NOTE: must be global over the ORIGINAL (un-padded) x so batch tiling is exact.
    xf32 = x.astype(jnp.float32)
    x_min = jnp.min(xf32)
    x_max = jnp.max(xf32)
    inv_range = 1.0 / (x_max - x_min)   # same divide-by-zero behavior as the PyTorch ref
    scale_bias = jnp.stack([2.0 * inv_range,
                            -2.0 * x_min * inv_range - 1.0]).astype(jnp.float32)  # (2,)

    # ---- fused weight slab: row blocks = [base | P0 | P1 | ... | Pd], each Fin_p rows ----
    bw_t = base_weight.T.astype(jnp.float32)                                   # (Fin, Fout)
    # poly_weight[o, i*(degree+1)+d] -> pw_r[d, i, o]
    pw_r = poly_weight.reshape(Fout, Fin, degree + 1).transpose(2, 1, 0)
    pw_r = pw_r.astype(jnp.float32)                                            # (deg+1, Fin, Fout)
    w_slab = jnp.zeros((degree + 2, Fin_p, Fout_p), jnp.float32)
    w_slab = w_slab.at[0, :Fin, :Fout].set(bw_t)
    w_slab = w_slab.at[1:, :Fin, :Fout].set(pw_r)
    w_slab = w_slab.reshape(k_slab, Fout_p).astype(jnp.bfloat16)               # (K, Fout_p)

    gamma = jnp.zeros((1, Fout_p), jnp.float32).at[0, :Fout].set(ln_gamma.astype(jnp.float32))
    beta = jnp.zeros((1, Fout_p), jnp.float32).at[0, :Fout].set(ln_beta.astype(jnp.float32))

    # Pad x in its NATIVE dtype (no wrapper upcast; the kernel casts in-VPU).
    if (B_p, Fin_p) != (B, Fin):
        x_p = jnp.zeros((B_p, Fin_p), x.dtype).at[:B, :Fin].set(x)
    else:
        x_p = x

    kernel = functools.partial(_legendre_kan_kernel,
                               degree=degree, eps=eps, fout_real=Fout)

    # VMEM budget: resident bf16 weight slab + double-buffered x/out tiles + basis.
    vmem_bytes = (k_slab * Fout_p * 2                       # weight slab (bf16)
                  + 2 * tb * Fin_p * x_p.dtype.itemsize     # x tile, double-buffered
                  + 2 * tb * Fout_p * 4                     # out tile, double-buffered
                  + tb * k_slab * (4 + 2)                   # f32 pieces + bf16 basis
                  + (2 << 20))                              # slack
    vmem_bytes = int(min(max(2 * vmem_bytes, 32 * 1024 * 1024),
                         64 * 1024 * 1024))                 # stay within v7x's 64 MiB

    out_p = pl.pallas_call(
        kernel,
        out_shape=jax.ShapeDtypeStruct((B_p, Fout_p), jnp.float32),
        grid=(B_p // tb,),
        in_specs=[
            pl.BlockSpec(memory_space=pltpu.MemorySpace.SMEM),        # (scale, bias)
            pl.BlockSpec((tb, Fin_p), lambda i: (i, 0)),              # x tile (streamed)
            pl.BlockSpec((k_slab, Fout_p), lambda i: (0, 0)),         # weight slab (resident)
            pl.BlockSpec((1, Fout_p), lambda i: (0, 0)),              # gamma (resident)
            pl.BlockSpec((1, Fout_p), lambda i: (0, 0)),              # beta  (resident)
        ],
        out_specs=pl.BlockSpec((tb, Fout_p), lambda i: (i, 0)),
        compiler_params=pltpu.CompilerParams(
            dimension_semantics=("parallel",),
            vmem_limit_bytes=vmem_bytes),
    )(scale_bias, x_p, w_slab, gamma, beta)

    if (B_p, Fout_p) != (B, Fout):
        return out_p[:B, :Fout]
    return out_p


def _reference_forward(x, base_weight, poly_weight, ln_gamma, ln_beta,
                       *, degree: int = 3, eps: float = 1e-5):
    """Pure-JAX f32 reference mirroring the PyTorch module, for validation."""
    silu = lambda v: v * jax.nn.sigmoid(v)
    base_out = silu(x) @ base_weight.T
    xn = 2.0 * (x - x.min()) / (x.max() - x.min()) - 1.0
    polys = [jnp.ones_like(xn), xn]
    for n in range(1, degree):
        polys.append(((2.0 * n + 1.0) * xn * polys[-1] - n * polys[-2]) / (n + 1.0))
    basis = jnp.stack(polys[: degree + 1], axis=-1).reshape(x.shape[0], -1)
    poly_out = basis @ poly_weight.T
    y = base_out + poly_out
    mean = y.mean(-1, keepdims=True)
    var = ((y - mean) ** 2).mean(-1, keepdims=True)
    y_hat = (y - mean) / jnp.sqrt(var + eps) * ln_gamma + ln_beta
    return silu(y_hat)


if __name__ == "__main__":
    B, Fin, Fout, degree = 8, 32, 32, 3

    key = jax.random.PRNGKey(0)
    k1, k2, k3 = jax.random.split(key, 3)

    # Deterministic kaiming_uniform-style init (gain=1 for 'linear').
    bound_b = (3.0 / Fin) ** 0.5
    bound_p = (3.0 / (Fin * (degree + 1))) ** 0.5
    base_weight = jax.random.uniform(k1, (Fout, Fin), jnp.float32,
                                     minval=-bound_b, maxval=bound_b)
    poly_weight = jax.random.uniform(k2, (Fout, Fin * (degree + 1)), jnp.float32,
                                     minval=-bound_p, maxval=bound_p)
    ln_gamma = jnp.ones((Fout,), jnp.float32)
    ln_beta = jnp.zeros((Fout,), jnp.float32)

    x = jax.random.normal(k3, (B, Fin), jnp.float32)

    out = legendre_kan_forward(x, base_weight, poly_weight, ln_gamma, ln_beta,
                               degree=degree)
    out = jax.block_until_ready(out)

    ref = _reference_forward(x, base_weight, poly_weight, ln_gamma, ln_beta,
                             degree=degree)
    assert out.shape == (B, Fout)
    # bf16 matmul operands (f32 accumulation) -> tolerance loosened vs f32 reference.
    assert jnp.allclose(out, ref, atol=5e-2, rtol=5e-2), "mismatch vs reference"

    print("KERNEL_OK")
</pallas_src>

<mosaic_0001>
module attributes {stable_mosaic.version = 11 : i64} {
  func.func @_legendre_kan_kernel(%arg0: i32, %arg1: memref<2xf32, #tpu.memory_space<smem>>, %arg2: memref<8x128xf32, #tpu.memory_space<vmem>>, %arg3: memref<640x128xbf16, #tpu.memory_space<vmem>>, %arg4: memref<1x128xf32, #tpu.memory_space<vmem>>, %arg5: memref<1x128xf32, #tpu.memory_space<vmem>>, %arg6: memref<8x128xf32, #tpu.memory_space<vmem>>) attributes {dimension_semantics = [#tpu.dimension_semantics<parallel>], iteration_bounds = array<i64: 1>, scalar_prefetch = 0 : i64, scratch_operands = 0 : i64, tpu.core_type = #tpu.core_type<tc>, window_params = [{transform_indices = @transform_0, window_bounds = array<i64: 2>}, {transform_indices = @transform_1, window_bounds = array<i64: 8, 128>}, {pipeline_mode = #tpu.pipeline_mode<synchronous>, transform_indices = @transform_2, window_bounds = array<i64: 640, 128>}, {pipeline_mode = #tpu.pipeline_mode<synchronous>, transform_indices = @transform_3, window_bounds = array<i64: 1, 128>}, {pipeline_mode = #tpu.pipeline_mode<synchronous>, transform_indices = @transform_4, window_bounds = array<i64: 1, 128>}, {transform_indices = @transform_5, window_bounds = array<i64: 8, 128>}]} {
    %c0 = arith.constant 0 : index
    %c0_0 = arith.constant 0 : index
    %0 = vector.load %arg2[%c0, %c0_0] : memref<8x128xf32, #tpu.memory_space<vmem>>, vector<8x128xf32>
    %c0_1 = arith.constant 0 : index
    %1 = memref.load %arg1[%c0_1] : memref<2xf32, #tpu.memory_space<smem>>
    %c1 = arith.constant 1 : index
    %2 = memref.load %arg1[%c1] : memref<2xf32, #tpu.memory_space<smem>>
    %3 = arith.negf %0 : vector<8x128xf32>
    %4 = math.exp %3 : vector<8x128xf32>
    %cst = arith.constant 1.000000e+00 : f32
    %5 = vector.broadcast %cst : f32 to vector<8x128xf32>
    %6 = arith.addf %5, %4 : vector<8x128xf32>
    %7 = arith.divf %5, %6 : vector<8x128xf32>
    %8 = arith.mulf %0, %7 : vector<8x128xf32>
    %9 = vector.broadcast %1 : f32 to vector<8x128xf32>
    %10 = arith.mulf %0, %9 : vector<8x128xf32>
    %11 = vector.broadcast %2 : f32 to vector<8x128xf32>
    %12 = arith.addf %10, %11 : vector<8x128xf32>
    %cst_2 = arith.constant 1.000000e+00 : f32
    %13 = vector.broadcast %cst_2 : f32 to vector<8x128xf32>
    %cst_3 = arith.constant 3.000000e+00 : f32
    %14 = vector.broadcast %cst_3 : f32 to vector<8x128xf32>
    %15 = arith.mulf %14, %12 : vector<8x128xf32>
    %16 = arith.mulf %15, %12 : vector<8x128xf32>
    %cst_4 = arith.constant 1.000000e+00 : f32
    %17 = vector.broadcast %cst_4 : f32 to vector<8x128xf32>
    %18 = arith.mulf %17, %13 : vector<8x128xf32>
    %19 = arith.subf %16, %18 : vector<8x128xf32>
    %cst_5 = arith.constant 5.000000e-01 : f32
    %20 = vector.broadcast %cst_5 : f32 to vector<8x128xf32>
    %21 = arith.mulf %19, %20 : vector<8x128xf32>
    %cst_6 = arith.constant 5.000000e+00 : f32
    %22 = vector.broadcast %cst_6 : f32 to vector<8x128xf32>
    %23 = arith.mulf %22, %12 : vector<8x128xf32>
    %24 = arith.mulf %23, %21 : vector<8x128xf32>
    %cst_7 = arith.constant 2.000000e+00 : f32
    %25 = vector.broadcast %cst_7 : f32 to vector<8x128xf32>
    %26 = arith.mulf %25, %12 : vector<8x128xf32>
    %27 = arith.subf %24, %26 : vector<8x128xf32>
    %cst_8 = arith.constant 0.333333343 : f32
    %28 = vector.broadcast %cst_8 : f32 to vector<8x128xf32>
    %29 = arith.mulf %27, %28 : vector<8x128xf32>
    %30 = tpu.concatenate %8, %13, %12, %21, %29 in 1 : vector<8x128xf32>, vector<8x128xf32>, vector<8x128xf32>, vector<8x128xf32>, vector<8x128xf32> -> vector<8x640xf32>
    %31 = arith.truncf %30 : vector<8x640xf32> to vector<8x640xbf16>
    %c0_9 = arith.constant 0 : index
    %c0_10 = arith.constant 0 : index
    %32 = vector.load %arg3[%c0_9, %c0_10] : memref<640x128xbf16, #tpu.memory_space<vmem>>, vector<640x128xbf16>
    %cst_11 = arith.constant dense<0.000000e+00> : vector<8x128xf32>
    %33 = tpu.matmul %31, %32, %cst_11 {dimension_numbers = #tpu.dot_dimension_numbers<[1], [0], [0], [1], [0, 0, 1, 1], [], []>} : vector<8x640xbf16>, vector<640x128xbf16>, vector<8x128xf32> -> vector<8x128xf32>
    %cst_12 = arith.constant dense<0.000000e+00> : vector<8xf32>
    %34 = vector.multi_reduction <add>, %33, %cst_12 [1] : vector<8x128xf32> to vector<8xf32>
    %35 = vector.shape_cast %34 : vector<8xf32> to vector<8x1xf32>
    %36 = arith.mulf %33, %33 : vector<8x128xf32>
    %cst_13 = arith.constant dense<0.000000e+00> : vector<8xf32>
    %37 = vector.multi_reduction <add>, %36, %cst_13 [1] : vector<8x128xf32> to vector<8xf32>
    %38 = vector.shape_cast %37 : vector<8xf32> to vector<8x1xf32>
    %cst_14 = arith.constant 3.125000e-02 : f32
    %39 = vector.broadcast %cst_14 : f32 to vector<8x1xf32>
    %40 = arith.mulf %35, %39 : vector<8x1xf32>
    %cst_15 = arith.constant 3.125000e-02 : f32
    %41 = vector.broadcast %cst_15 : f32 to vector<8x1xf32>
    %42 = arith.mulf %38, %41 : vector<8x1xf32>
    %43 = arith.mulf %40, %40 : vector<8x1xf32>
    %44 = arith.subf %42, %43 : vector<8x1xf32>
    %45 = vector.broadcast %40 : vector<8x1xf32> to vector<8x128xf32>
    %46 = arith.subf %33, %45 : vector<8x128xf32>
    %cst_16 = arith.constant 9.99999974E-6 : f32
    %47 = vector.broadcast %cst_16 : f32 to vector<8x1xf32>
    %48 = arith.addf %44, %47 : vector<8x1xf32>
    %49 = math.rsqrt %48 : vector<8x1xf32>
    %50 = vector.broadcast %49 : vector<8x1xf32> to vector<8x128xf32>
    %51 = arith.mulf %46, %50 : vector<8x128xf32>
    %c0_17 = arith.constant 0 : index
    %c0_18 = arith.constant 0 : index
    %52 = vector.load %arg4[%c0_17, %c0_18] : memref<1x128xf32, #tpu.memory_space<vmem>>, vector<1x128xf32>
    %53 = vector.broadcast %52 : vector<1x128xf32> to vector<8x128xf32>
    %54 = arith.mulf %51, %53 : vector<8x128xf32>
    %c0_19 = arith.constant 0 : index
    %c0_20 = arith.constant 0 : index
    %55 = vector.load %arg5[%c0_19, %c0_20] : memref<1x128xf32, #tpu.memory_space<vmem>>, vector<1x128xf32>
    %56 = vector.broadcast %55 : vector<1x128xf32> to vector<8x128xf32>
    %57 = arith.addf %54, %56 : vector<8x128xf32>
    %58 = arith.negf %57 : vector<8x128xf32>
    %59 = math.exp %58 : vector<8x128xf32>
    %cst_21 = arith.constant 1.000000e+00 : f32
    %60 = vector.broadcast %cst_21 : f32 to vector<8x128xf32>
    %61 = arith.addf %60, %59 : vector<8x128xf32>
    %62 = arith.divf %60, %61 : vector<8x128xf32>
    %63 = arith.mulf %57, %62 : vector<8x128xf32>
    %c0_22 = arith.constant 0 : index
    %c0_23 = arith.constant 0 : index
    %64 = vector.load %arg6[%c0_22, %c0_23] : memref<8x128xf32, #tpu.memory_space<vmem>>, vector<8x128xf32>
    tpu.vector_store %arg6[%c0_22, %c0_23], %63 {strides = array<i32>} : memref<8x128xf32, #tpu.memory_space<vmem>>, vector<8x128xf32>,
    return
  }
  func.func @transform_0(%arg0: i32) -> i32 {
    %c0_i32 = arith.constant 0 : i32
    %c0_i32_0 = arith.constant 0 : i32
    return %c0_i32 : i32
  }
  func.func @transform_1(%arg0: i32) -> (i32, i32) {
    %c0_i32 = arith.constant 0 : i32
    %c0_i32_0 = arith.constant 0 : i32
    return %arg0, %c0_i32 : i32, i32
  }
  func.func @transform_2(%arg0: i32) -> (i32, i32) {
    %c0_i32 = arith.constant 0 : i32
    %c0_i32_0 = arith.constant 0 : i32
    %c0_i32_1 = arith.constant 0 : i32
    return %c0_i32, %c0_i32_0 : i32, i32
  }
  func.func @transform_3(%arg0: i32) -> (i32, i32) {
    %c0_i32 = arith.constant 0 : i32
    %c0_i32_0 = arith.constant 0 : i32
    %c0_i32_1 = arith.constant 0 : i32
    return %c0_i32, %c0_i32_0 : i32, i32
  }
  func.func @transform_4(%arg0: i32) -> (i32, i32) {
    %c0_i32 = arith.constant 0 : i32
    %c0_i32_0 = arith.constant 0 : i32
    %c0_i32_1 = arith.constant 0 : i32
    return %c0_i32, %c0_i32_0 : i32, i32
  }
  func.func @transform_5(%arg0: i32) -> (i32, i32) {
    %c0_i32 = arith.constant 0 : i32
    %c0_i32_0 = arith.constant 0 : i32
    return %arg0, %c0_i32 : i32, i32
  }
}

</mosaic_0001>

<llo_original>
// kernel: tpu_custom_call.1
$region0: #{tpu_custom_call.1}
  #allocation0 [shape = 'u32[]', space=smem, size = 0x4, offset = 0x4, fixed_abs, tag = 'smem constant byte address 0x4 - core index']
  #allocation1 [shape = 'u32[72,128]{1,0:T(1,128)}', space=vmem, size = 0x9000, scoped, tag = 'internal scratch']
  %s0 = inlined_call_operand.hbm [shape: f32[2], index: 0, kind: input, shape index: {}]
  %s1 = inlined_call_operand.hbm [shape: f32[8,128], index: 1, kind: input, shape index: {}]
  %s2 = inlined_call_operand.hbm [shape: bf16[640,128], index: 2, kind: input, shape index: {}]
  %s3 = inlined_call_operand.vmem [shape: f32[1,128], index: 3, kind: input, shape index: {}]
  %s4 = inlined_call_operand.vmem [shape: f32[1,128], index: 4, kind: input, shape index: {}]
  %s5 = inlined_call_operand.hbm [shape: f32[8,128], index: 5, kind: output, shape index: {}]
  %s6 = sld [smem:[#allocation0]]
  $region42: #{tpu_custom_call.1} parent=0
    _
  %s8 = ssub.s32 1, %s6
  %s9 = scalar_select 0, %s8, %s6
  $region1: #{tpu_custom_call.1} parent=0
    #allocation2 [shape = 'u8[512]{0}', space=smem, size = 0x200, scoped, tag = 'input window, operand 0, single buffered']
    #allocation3 [shape = 's32[1]{0}', space=sflag, size = 0x4, scoped, tag = 'scoped memory for tpu_custom_call.1']
    #allocation4 [shape = 's32[1]{0}', space=sflag, size = 0x4, scoped, tag = 'scoped memory for tpu_custom_call.1']
    #allocation5 [shape = 's32[1]{0}', space=sflag, size = 0x4, scoped, tag = 'scoped memory for tpu_custom_call.1']
    #allocation6 [shape = 'u8[4096]{0}', space=vmem, size = 0x1000, scoped, tag = 'input window, operand 1, single buffered']
    #allocation7 [shape = 'u8[163840]{0}', space=vmem, size = 0x28000, scoped, tag = 'input window, operand 2, single buffered']
    #allocation8 [shape = 's32[1]{0}', space=sflag, size = 0x4, scoped, tag = 'scoped memory for tpu_custom_call.1']
    #allocation9 [shape = 'u8[4096]{0}', space=vmem, size = 0x1000, scoped, tag = 'output window, operand 0, single buffered']
    %10 = vsyncpa [#allocation5], 0
    %11 = vsyncpa [#allocation3], 0
    %12 = vsyncpa [#allocation8], 0
    %13 = vsyncpa [#allocation4], 0
    // Predicated region
    $region2: #{tpu_custom_call.1} parent=1 // pred_check
      _
    $region3: #{tpu_custom_call.1} parent=1 // pred_check_branch
      %15 = sbr.rel (0) target = $region5
    $region4: #{tpu_custom_call.1} parent=1 // pred_region
      %17 = vsyncadd [#allocation5], 0
      %s19 = sshll.u32 %s0, 4
      %s20 = int_to_ptr.hbm [resolvable:$true] %s19
      %22 = dma.hbm_to_smem %s20, 16, [#allocation2], [#allocation5]
    $region5: #{tpu_custom_call.1} parent=1 // pred_fallthru
      _
    // Predicated region
    $region6: #{tpu_custom_call.1} parent=1 // pred_check
      _
    $region7: #{tpu_custom_call.1} parent=1 // pred_check_branch
      %24 = sbr.rel (0) target = $region9
    $region8: #{tpu_custom_call.1} parent=1 // pred_region
      %26 = vsyncadd [#allocation3], 0
      %s28 = sshll.u32 %s1, 4
      %s29 = int_to_ptr.hbm [resolvable:$true] %s28
      %s30 = sshll.u32 [#allocation6], 4
      %s31 = int_to_ptr.vmem [resolvable:$true] %s30
      %33 = dma.hbm_to_vmem [thread:$0]  %s29, 128, %s31, [#allocation3]
    $region9: #{tpu_custom_call.1} parent=1 // pred_fallthru
      _
    // Predicated region
    $region10: #{tpu_custom_call.1} parent=1 // pred_check
      _
    $region11: #{tpu_custom_call.1} parent=1 // pred_check_branch
      %35 = sbr.rel (0) target = $region13
    $region12: #{tpu_custom_call.1} parent=1 // pred_region
      %37 = vsyncadd [#allocation8], 0
      %s38 = sshll.u32 %s2, 4
      %s39 = int_to_ptr.hbm [resolvable:$true] %s38
      %s40 = sshll.u32 [#allocation7], 4
      %s41 = int_to_ptr.vmem [resolvable:$true] %s40
      %46 = dma.hbm_to_vmem [thread:$0]  %s39, 5120, %s41, [#allocation8], 64, 64, 4
    $region13: #{tpu_custom_call.1} parent=1 // pred_fallthru
      _
    // Predicated region
    $region14: #{tpu_custom_call.1} parent=1 // pred_check
      _
    $region15: #{tpu_custom_call.1} parent=1 // pred_check_branch
      %48 = sbr.rel (0) target = $region17
    $region16: #{tpu_custom_call.1} parent=1 // pred_region
      _
    $region17: #{tpu_custom_call.1} parent=1 // pred_fallthru
      _
    // Predicated region
    $region18: #{tpu_custom_call.1} parent=1 // pred_check
      _
    $region19: #{tpu_custom_call.1} parent=1 // pred_check_branch
      %50 = sbr.rel (0) target = $region21
    $region20: #{tpu_custom_call.1} parent=1 // pred_region
      _
    $region21: #{tpu_custom_call.1} parent=1 // pred_fallthru
      _
    // Predicated region
    $region22: #{tpu_custom_call.1} parent=1 // pred_check
      _
    $region23: #{tpu_custom_call.1} parent=1 // pred_check_branch
      %52 = sbr.rel (0) target = $region25
    $region24: #{tpu_custom_call.1} parent=1 // pred_region
      %54 = dma.done [#allocation5], 16
    $region25: #{tpu_custom_call.1} parent=1 // pred_fallthru
      _
    // Predicated region
    $region26: #{tpu_custom_call.1} parent=1 // pred_check
      _
    $region27: #{tpu_custom_call.1} parent=1 // pred_check_branch
      %56 = sbr.rel (0) target = $region29
    $region28: #{tpu_custom_call.1} parent=1 // pred_region
      %58 = dma.done [#allocation3], 128
    $region29: #{tpu_custom_call.1} parent=1 // pred_fallthru
      _
    // Predicated region
    $region30: #{tpu_custom_call.1} parent=1 // pred_check
      _
    $region31: #{tpu_custom_call.1} parent=1 // pred_check_branch
      %60 = sbr.rel (0) target = $region33
    $region32: #{tpu_custom_call.1} parent=1 // pred_region
      %62 = dma.done [#allocation8], 5120
    $region33: #{tpu_custom_call.1} parent=1 // pred_fallthru
      _
    %63 = sfence
    %v64 = vld [vmem:[#allocation6] sm:$0xff]
    %s65 = sld [smem:[#allocation2]]
    %s66 = sld [smem:[#allocation2 + $0x1]]
    %v67 = vxor.u32 %v64, 2147483648
    %v68 = vmul.f32 %v67, 1.442695
    %v69 = vpow.pop %v68
    %v70 = vadd.f32 %v69, 1.0
    %v71 = vrcp.pop %v70
    %v72 = vmul.f32 %v70, %v71
    %v73 = vsub.f32 1.0, %v72
    %v74 = vmul.f32 %v71, %v73
    %v75 = vadd.f32 %v71, %v74
    %vm76 = vweird.f32 %v70
    %vm77 = vweird.f32 %v71
    %vm78 = vmor %vm76, %vm77
    %v79 = vsel %vm78, %v71, %v75
    %v80 = vand.u32 2147483647, %v70
    %vm81 = vcmp.eq.f32.partialorder %v80, 8.507059e+37
    %v82 = vand.u32 %v70, 2147483648
    %v83 = vor.u32 1.1754944e-38, %v82
    %v84 = vsel %vm81, %v83, %v79
    %v85 = vmul.f32 1.0, %v84
    %v86 = vmul.f32 %v64, %v85
    %v87 = vstv %s65
    %v88 = vmul.f32 %v64, %v87
    %v89 = vstv %s66
    %v90 = vadd.f32 %v88, %v89
    %v91 = vmul.f32 %v90, 3.0
    %v92 = vmul.f32 %v91, %v90
    %v93 = vsub.f32 %v92, 1.0
    %v94 = vmul.f32 %v93, 0.5
    %v95 = vmul.f32 %v90, 5.0
    %v96 = vmul.f32 %v95, %v94
    %v97 = vmul.f32 %v90, 2.0
    %v98 = vsub.f32 %v96, %v97
    %v99 = vmul.f32 %v98, 0.33333334
    %v100 = vpack.c.bf16 %v86, %v86
    %v101 = vpack.c.bf16 1.0, 1.0
    %v102 = vpack.c.bf16 %v90, %v90
    %v103 = vpack.c.bf16 %v94, %v94
    %v104 = vpack.c.bf16 %v99, %v99
    %v105 = vld [vmem:[#allocation7] sm:$0xf]
    %v106 = vld [vmem:[#allocation7 + $0x4] sm:$0xf]
    %v107 = vld [vmem:[#allocation7 + $0x8] sm:$0xf]
    %v108 = vld [vmem:[#allocation7 + $0xc] sm:$0xf]
    %v109 = vld [vmem:[#allocation7 + $0x10] sm:$0xf]
    %v110 = vld [vmem:[#allocation7 + $0x14] sm:$0xf]
    %v111 = vld [vmem:[#allocation7 + $0x18] sm:$0xf]
    %v112 = vld [vmem:[#allocation7 + $0x1c] sm:$0xf]
    %v113 = vld [vmem:[#allocation7 + $0x20] sm:$0xf]
    %v114 = vld [vmem:[#allocation7 + $0x24] sm:$0xf]
    %v115 = vld [vmem:[#allocation7 + $0x28] sm:$0xf]
    %v116 = vld [vmem:[#allocation7 + $0x2c] sm:$0xf]
    %v117 = vld [vmem:[#allocation7 + $0x30] sm:$0xf]
    %v118 = vld [vmem:[#allocation7 + $0x34] sm:$0xf]
    %v119 = vld [vmem:[#allocation7 + $0x38] sm:$0xf]
    %v120 = vld [vmem:[#allocation7 + $0x3c] sm:$0xf]
    %v121 = vld [vmem:[#allocation7 + $0x40] sm:$0xf]
    %v122 = vld [vmem:[#allocation7 + $0x44] sm:$0xf]
    %v123 = vld [vmem:[#allocation7 + $0x48] sm:$0xf]
    %v124 = vld [vmem:[#allocation7 + $0x4c] sm:$0xf]
    %v125 = vld [vmem:[#allocation7 + $0x50] sm:$0xf]
    %v126 = vld [vmem:[#allocation7 + $0x54] sm:$0xf]
    %v127 = vld [vmem:[#allocation7 + $0x58] sm:$0xf]
    %v128 = vld [vmem:[#allocation7 + $0x5c] sm:$0xf]
    %v129 = vld [vmem:[#allocation7 + $0x60] sm:$0xf]
    %v130 = vld [vmem:[#allocation7 + $0x64] sm:$0xf]
    %v131 = vld [vmem:[#allocation7 + $0x68] sm:$0xf]
    %v132 = vld [vmem:[#allocation7 + $0x6c] sm:$0xf]
    %v133 = vld [vmem:[#allocation7 + $0x70] sm:$0xf]
    %v134 = vld [vmem:[#allocation7 + $0x74] sm:$0xf]
    %v135 = vld [vmem:[#allocation7 + $0x78] sm:$0xf]
    %v136 = vld [vmem:[#allocation7 + $0x7c] sm:$0xf]
    %v137 = vld [vmem:[#allocation7 + $0x80] sm:$0xf]
    %v138 = vld [vmem:[#allocation7 + $0x84] sm:$0xf]
    %v139 = vld [vmem:[#allocation7 + $0x88] sm:$0xf]
    %v140 = vld [vmem:[#allocation7 + $0x8c] sm:$0xf]
    %v141 = vld [vmem:[#allocation7 + $0x90] sm:$0xf]
    %v142 = vld [vmem:[#allocation7 + $0x94] sm:$0xf]
    %v143 = vld [vmem:[#allocation7 + $0x98] sm:$0xf]
    %v144 = vld [vmem:[#allocation7 + $0x9c] sm:$0xf]
    %v145 = vld [vmem:[#allocation7 + $0xa0] sm:$0xf]
    %v146 = vld [vmem:[#allocation7 + $0xa4] sm:$0xf]
    %v147 = vld [vmem:[#allocation7 + $0xa8] sm:$0xf]
    %v148 = vld [vmem:[#allocation7 + $0xac] sm:$0xf]
    %v149 = vld [vmem:[#allocation7 + $0xb0] sm:$0xf]
    %v150 = vld [vmem:[#allocation7 + $0xb4] sm:$0xf]
    %v151 = vld [vmem:[#allocation7 + $0xb8] sm:$0xf]
    %v152 = vld [vmem:[#allocation7 + $0xbc] sm:$0xf]
    %v153 = vld [vmem:[#allocation7 + $0xc0] sm:$0xf]
    %v154 = vld [vmem:[#allocation7 + $0xc4] sm:$0xf]
    %v155 = vld [vmem:[#allocation7 + $0xc8] sm:$0xf]
    %v156 = vld [vmem:[#allocation7 + $0xcc] sm:$0xf]
    %v157 = vld [vmem:[#allocation7 + $0xd0] sm:$0xf]
    %v158 = vld [vmem:[#allocation7 + $0xd4] sm:$0xf]
    %v159 = vld [vmem:[#allocation7 + $0xd8] sm:$0xf]
    %v160 = vld [vmem:[#allocation7 + $0xdc] sm:$0xf]
    %v161 = vld [vmem:[#allocation7 + $0xe0] sm:$0xf]
    %v162 = vld [vmem:[#allocation7 + $0xe4] sm:$0xf]
    %v163 = vld [vmem:[#allocation7 + $0xe8] sm:$0xf]
    %v164 = vld [vmem:[#allocation7 + $0xec] sm:$0xf]
    %v165 = vld [vmem:[#allocation7 + $0xf0] sm:$0xf]
    %v166 = vld [vmem:[#allocation7 + $0xf4] sm:$0xf]
    %v167 = vld [vmem:[#allocation7 + $0xf8] sm:$0xf]
    %v168 = vld [vmem:[#allocation7 + $0xfc] sm:$0xf]
    %v169 = vld [vmem:[#allocation7 + $0x100] sm:$0xf]
    %v170 = vld [vmem:[#allocation7 + $0x104] sm:$0xf]
    %v171 = vld [vmem:[#allocation7 + $0x108] sm:$0xf]
    %v172 = vld [vmem:[#allocation7 + $0x10c] sm:$0xf]
    %v173 = vld [vmem:[#allocation7 + $0x110] sm:$0xf]
    %v174 = vld [vmem:[#allocation7 + $0x114] sm:$0xf]
    %v175 = vld [vmem:[#allocation7 + $0x118] sm:$0xf]
    %v176 = vld [vmem:[#allocation7 + $0x11c] sm:$0xf]
    %v177 = vld [vmem:[#allocation7 + $0x120] sm:$0xf]
    %v178 = vld [vmem:[#allocation7 + $0x124] sm:$0xf]
    %v179 = vld [vmem:[#allocation7 + $0x128] sm:$0xf]
    %v180 = vld [vmem:[#allocation7 + $0x12c] sm:$0xf]
    %v181 = vld [vmem:[#allocation7 + $0x130] sm:$0xf]
    %v182 = vld [vmem:[#allocation7 + $0x134] sm:$0xf]
    %v183 = vld [vmem:[#allocation7 + $0x138] sm:$0xf]
    %v184 = vld [vmem:[#allocation7 + $0x13c] sm:$0xf]
    %v265 = vunpack.c.l.b16 %v105
    %v266 = vunpack.c.l.b16 %v106
    %v267 = vunpack.c.l.b16 %v107
    %v268 = vunpack.c.l.b16 %v108
    %v269 = vunpack.c.l.b16 %v109
    %v270 = vunpack.c.l.b16 %v110
    %v271 = vunpack.c.l.b16 %v111
    %v272 = vunpack.c.l.b16 %v112
    %v273 = vunpack.c.l.b16 %v113
    %v274 = vunpack.c.l.b16 %v114
    %v275 = vunpack.c.l.b16 %v115
    %v276 = vunpack.c.l.b16 %v116
    %v277 = vunpack.c.l.b16 %v117
    %v278 = vunpack.c.l.b16 %v118
    %v279 = vunpack.c.l.b16 %v119
    %v280 = vunpack.c.l.b16 %v120
    %v281 = vunpack.c.l.b16 %v121
    %v282 = vunpack.c.l.b16 %v122
    %v283 = vunpack.c.l.b16 %v123
    %v284 = vunpack.c.l.b16 %v124
    %v285 = vunpack.c.l.b16 %v125
    %v286 = vunpack.c.l.b16 %v126
    %v287 = vunpack.c.l.b16 %v127
    %v288 = vunpack.c.l.b16 %v128
    %v289 = vunpack.c.l.b16 %v129
    %v290 = vunpack.c.l.b16 %v130
    %v291 = vunpack.c.l.b16 %v131
    %v292 = vunpack.c.l.b16 %v132
    %v293 = vunpack.c.l.b16 %v133
    %v294 = vunpack.c.l.b16 %v134
    %v295 = vunpack.c.l.b16 %v135
    %v296 = vunpack.c.l.b16 %v136
    %v297 = vunpack.c.l.b16 %v137
    %v298 = vunpack.c.l.b16 %v138
    %v299 = vunpack.c.l.b16 %v139
    %v300 = vunpack.c.l.b16 %v140
    %v301 = vunpack.c.l.b16 %v141
    %v302 = vunpack.c.l.b16 %v142
    %v303 = vunpack.c.l.b16 %v143
    %v304 = vunpack.c.l.b16 %v144
    %v305 = vunpack.c.l.b16 %v145
    %v306 = vunpack.c.l.b16 %v146
    %v307 = vunpack.c.l.b16 %v147
    %v308 = vunpack.c.l.b16 %v148
    %v309 = vunpack.c.l.b16 %v149
    %v310 = vunpack.c.l.b16 %v150
    %v311 = vunpack.c.l.b16 %v151
    %v312 = vunpack.c.l.b16 %v152
    %v313 = vunpack.c.l.b16 %v153
    %v314 = vunpack.c.l.b16 %v154
    %v315 = vunpack.c.l.b16 %v155
    %v316 = vunpack.c.l.b16 %v156
    %v317 = vunpack.c.l.b16 %v157
    %v318 = vunpack.c.l.b16 %v158
    %v319 = vunpack.c.l.b16 %v159
    %v320 = vunpack.c.l.b16 %v160
    %v321 = vunpack.c.l.b16 %v161
    %v322 = vunpack.c.l.b16 %v162
    %v323 = vunpack.c.l.b16 %v163
    %v324 = vunpack.c.l.b16 %v164
    %v325 = vunpack.c.l.b16 %v165
    %v326 = vunpack.c.l.b16 %v166
    %v327 = vunpack.c.l.b16 %v167
    %v328 = vunpack.c.l.b16 %v168
    %v329 = vunpack.c.l.b16 %v169
    %v330 = vunpack.c.l.b16 %v170
    %v331 = vunpack.c.l.b16 %v171
    %v332 = vunpack.c.l.b16 %v172
    %v333 = vunpack.c.l.b16 %v173
    %v334 = vunpack.c.l.b16 %v174
    %v335 = vunpack.c.l.b16 %v175
    %v336 = vunpack.c.l.b16 %v176
    %v337 = vunpack.c.l.b16 %v177
    %v338 = vunpack.c.l.b16 %v178
    %v339 = vunpack.c.l.b16 %v179
    %v340 = vunpack.c.l.b16 %v180
    %v341 = vunpack.c.l.b16 %v181
    %v342 = vunpack.c.l.b16 %v182
    %v343 = vunpack.c.l.b16 %v183
    %v344 = vunpack.c.l.b16 %v184
    %v345 = vpack.c.b16 %v266, %v265
    %v346 = vpack.c.b16 %v268, %v267
    %v347 = vpack.c.b16 %v270, %v269
    %v348 = vpack.c.b16 %v272, %v271
    %v349 = vpack.c.b16 %v274, %v273
    %v350 = vpack.c.b16 %v276, %v275
    %v351 = vpack.c.b16 %v278, %v277
    %v352 = vpack.c.b16 %v280, %v279
    %v353 = vpack.c.b16 %v282, %v281
    %v354 = vpack.c.b16 %v284, %v283
    %v355 = vpack.c.b16 %v286, %v285
    %v356 = vpack.c.b16 %v288, %v287
    %v357 = vpack.c.b16 %v290, %v289
    %v358 = vpack.c.b16 %v292, %v291
    %v359 = vpack.c.b16 %v294, %v293
    %v360 = vpack.c.b16 %v296, %v295
    %v361 = vpack.c.b16 %v298, %v297
    %v362 = vpack.c.b16 %v300, %v299
    %v363 = vpack.c.b16 %v302, %v301
    %v364 = vpack.c.b16 %v304, %v303
    %v365 = vpack.c.b16 %v306, %v305
    %v366 = vpack.c.b16 %v308, %v307
    %v367 = vpack.c.b16 %v310, %v309
    %v368 = vpack.c.b16 %v312, %v311
    %v369 = vpack.c.b16 %v314, %v313
    %v370 = vpack.c.b16 %v316, %v315
    %v371 = vpack.c.b16 %v318, %v317
    %v372 = vpack.c.b16 %v320, %v319
    %v373 = vpack.c.b16 %v322, %v321
    %v374 = vpack.c.b16 %v324, %v323
    %v375 = vpack.c.b16 %v326, %v325
    %v376 = vpack.c.b16 %v328, %v327
    %v377 = vpack.c.b16 %v330, %v329
    %v378 = vpack.c.b16 %v332, %v331
    %v379 = vpack.c.b16 %v334, %v333
    %v380 = vpack.c.b16 %v336, %v335
    %v381 = vpack.c.b16 %v338, %v337
    %v382 = vpack.c.b16 %v340, %v339
    %v383 = vpack.c.b16 %v342, %v341
    %v384 = vpack.c.b16 %v344, %v343
    %425 = vmatpush.bf16.msra.mxu0 %v352
    %426 = vmatpush.bf16.msra.mxu0 %v351
    %427 = vmatpush.bf16.msra.mxu0 %v350
    %428 = vmatpush.bf16.msra.mxu0 %v349
    %429 = vmatpush.bf16.msra.mxu0 %v348
    %430 = vmatpush.bf16.msra.mxu0 %v347
    %431 = vmatpush.bf16.msra.mxu0 %v346
    %432 = vmatpush.bf16.msra.mxu0 %v345
    %433 = vmatmul.bf16.gmra.mxu0 %v100
    %v434 = vpop.f32.mrf.mxu0
    %v435 = vadd.f32 0.0, %v434
    %v436 = vpop.f32.mrf.mxu0
    %437 = vdwg.mxu0
    %438 = vmatpush.bf16.msra.mxu0 %v360
    %439 = vmatpush.bf16.msra.mxu0 %v359
    %440 = vmatpush.bf16.msra.mxu0 %v358
    %441 = vmatpush.bf16.msra.mxu0 %v357
    %442 = vmatpush.bf16.msra.mxu0 %v356
    %443 = vmatpush.bf16.msra.mxu0 %v355
    %444 = vmatpush.bf16.msra.mxu0 %v354
    %445 = vmatpush.bf16.msra.mxu0 %v353
    %446 = vmatmul.bf16.gmra.mxu0 %v101
    %v447 = vpop.f32.mrf.mxu0
    %v448 = vadd.f32 %v435, %v447
    %v449 = vpop.f32.mrf.mxu0
    %450 = vdwg.mxu0
    %451 = vmatpush.bf16.msra.mxu0 %v368
    %452 = vmatpush.bf16.msra.mxu0 %v367
    %453 = vmatpush.bf16.msra.mxu0 %v366
    %454 = vmatpush.bf16.msra.mxu0 %v365
    %455 = vmatpush.bf16.msra.mxu0 %v364
    %456 = vmatpush.bf16.msra.mxu0 %v363
    %457 = vmatpush.bf16.msra.mxu0 %v362
    %458 = vmatpush.bf16.msra.mxu0 %v361
    %459 = vmatmul.bf16.gmra.mxu0 %v102
    %v460 = vpop.f32.mrf.mxu0
    %v461 = vadd.f32 %v448, %v460
    %v462 = vpop.f32.mrf.mxu0
    %463 = vdwg.mxu0
    %464 = vmatpush.bf16.msra.mxu0 %v376
    %465 = vmatpush.bf16.msra.mxu0 %v375
    %466 = vmatpush.bf16.msra.mxu0 %v374
    %467 = vmatpush.bf16.msra.mxu0 %v373
    %468 = vmatpush.bf16.msra.mxu0 %v372
    %469 = vmatpush.bf16.msra.mxu0 %v371
    %470 = vmatpush.bf16.msra.mxu0 %v370
    %471 = vmatpush.bf16.msra.mxu0 %v369
    %472 = vmatmul.bf16.gmra.mxu0 %v103
    %v473 = vpop.f32.mrf.mxu0
    %v474 = vadd.f32 %v461, %v473
    %v475 = vpop.f32.mrf.mxu0
    %476 = vdwg.mxu0
    %477 = vmatpush.bf16.msra.mxu0 %v384
    %478 = vmatpush.bf16.msra.mxu0 %v383
    %479 = vmatpush.bf16.msra.mxu0 %v382
    %480 = vmatpush.bf16.msra.mxu0 %v381
    %481 = vmatpush.bf16.msra.mxu0 %v380
    %482 = vmatpush.bf16.msra.mxu0 %v379
    %483 = vmatpush.bf16.msra.mxu0 %v378
    %484 = vmatpush.bf16.msra.mxu0 %v377
    %485 = vmatmul.bf16.gmra.mxu0 %v104
    %v486 = vpop.f32.mrf.mxu0
    %v487 = vadd.f32 %v474, %v486
    %v488 = vpop.f32.mrf.mxu0
    %489 = vdwg.mxu0
    %490 = vadd.xlane.f32.xlu0 %v487
    %v491 = vpop.xlane.xlu0 %490
    %v492 = vmul.f32 %v487, %v487
    %493 = vadd.xlane.f32.xlu0 %v492
    %v494 = vpop.xlane.xlu0 %493
    %v495 = vmul.f32 %v491, 0.03125
    %v496 = vmul.f32 %v494, 0.03125
    %v497 = vmul.f32 %v495, %v495
    %v498 = vsub.f32 %v496, %v497
    %v499 = vsub.f32 %v487, %v495
    %v500 = vadd.f32 %v498, 1e-05
    %v501 = vrsqrt.pop %v500
    %v502 = vmul.f32 %v501, %v500
    %v503 = vmul.f32 %v502, %v501
    %v504 = vmul.f32 0.5, %v503
    %v505 = vsub.f32 1.5, %v504
    %v506 = vmul.f32 %v501, %v505
    %vm507 = vweird.f32 %v500
    %vm508 = vweird.f32 %v501
    %vm509 = vmor %vm507, %vm508
    %v510 = vsel %vm509, %v501, %v506
    %v511 = vmul.f32 %v499, %v510
    %v512 = vld [vmem:[%s3] sm:$0x1]
    %v514 = vperm.slane %v512, 0
    %v516 = vmul.f32 %v511, %v514
    %v517 = vld [vmem:[%s4] sm:$0x1]
    %v519 = vperm.slane %v517, 0
    %v521 = vadd.f32 %v516, %v519
    %v522 = vxor.u32 %v521, 2147483648
    %v523 = vmul.f32 %v522, 1.442695
    %v524 = vpow.pop %v523
    %v525 = vadd.f32 %v524, 1.0
    %v526 = vrcp.pop %v525
    %v527 = vmul.f32 %v525, %v526
    %v528 = vsub.f32 1.0, %v527
    %v529 = vmul.f32 %v526, %v528
    %v530 = vadd.f32 %v526, %v529
    %vm531 = vweird.f32 %v525
    %vm532 = vweird.f32 %v526
    %vm533 = vmor %vm531, %vm532
    %v534 = vsel %vm533, %v526, %v530
    %v535 = vand.u32 2147483647, %v525
    %vm536 = vcmp.eq.f32.partialorder %v535, 8.507059e+37
    %v537 = vand.u32 %v525, 2147483648
    %v538 = vor.u32 1.1754944e-38, %v537
    %v539 = vsel %vm536, %v538, %v534
    %v540 = vmul.f32 1.0, %v539
    %v541 = vmul.f32 %v521, %v540
    %542 = vst [vmem:[#allocation9] sm:$0xff] %v541
    // Predicated region
    $region34: #{tpu_custom_call.1} parent=1 // pred_check
      _
    $region35: #{tpu_custom_call.1} parent=1 // pred_check_branch
      %544 = sbr.rel (0) target = $region37
    $region36: #{tpu_custom_call.1} parent=1 // pred_region
      %546 = vsyncadd [#allocation4], 0
      %s548 = sshll.u32 [#allocation9], 4
      %s549 = int_to_ptr.vmem [resolvable:$true] %s548
      %s550 = sshll.u32 %s5, 4
      %s551 = int_to_ptr.hbm [resolvable:$true] %s550
      %553 = dma.vmem_to_hbm [thread:$0]  %s549, 128, %s551, [#allocation4]
    $region37: #{tpu_custom_call.1} parent=1 // pred_fallthru
      _
    // Predicated region
    $region38: #{tpu_custom_call.1} parent=1 // pred_check
      _
    $region39: #{tpu_custom_call.1} parent=1 // pred_check_branch
      %555 = sbr.rel (0) target = $region41
    $region40: #{tpu_custom_call.1} parent=1 // pred_region
      %557 = dma.done [#allocation4], 128
    $region41: #{tpu_custom_call.1} parent=1 // pred_fallthru
      _
    %558 = vsyncpa [#allocation3], 1
    %559 = vsyncpa [#allocation8], 1
    %560 = vsyncpa [#allocation4], 1
    %561 = vsyncpa [#allocation5], 1

</llo_original>
